<compile_context>
chip_gen: v6e
topology: v6e:2x2x1
jax: 0.10.0
libtpu: 0.0.40
codegen_flags: <defaults>
</compile_context>

<pallas_src>
import functools

import jax
import jax.numpy as jnp
from jax.experimental import pallas as pl
from jax.experimental.pallas import tpu as pltpu

EPS = 1e-5


def _round_up(v, m):
    return (v + m - 1) // m * m


def _vmem_capacity_bytes():
    try:
        return int(pltpu.get_tpu_info().vmem_capacity_bytes)
    except Exception:
        return 64 << 20  # conservative default: v7x per-TensorCore VMEM


_TILE_CANDIDATES = (4096, 3072, 2048, 1536, 1024, 768, 512, 384, 256, 128)


def _choose_dim_tiling(dim, max_tile, waste_frac=0.25):
    """Pick (padded_dim, tile): both multiples of 128, tile divides padded_dim,
    tile <= max_tile, padding waste bounded by waste_frac of the real extent."""
    max_tile = max(128, (int(max_tile) // 128) * 128)
    dim_p = _round_up(dim, 128)
    if dim_p <= max_tile:
        return dim_p, dim_p  # single tile, minimal padding
    for t in _TILE_CANDIDATES:
        if t > max_tile:
            continue
        padded = _round_up(dim, t)
        if padded - dim_p <= waste_frac * dim:
            return padded, t
    return dim_p, 128  # unreachable (t=128 always accepted), kept for safety


def fcbn_kernel(x_ref, w_ref, gb_ref, o_ref, *, n_valid):
    """One (out-tile j, K-tile k) grid step of Linear + training-mode BatchNorm1d."""
    k = pl.program_id(1)

    @pl.when(k == 0)
    def _init():
        o_ref[...] = jnp.zeros_like(o_ref)

    # MXU-native partial matmul: x[N, tk] @ w[tk, tn] contracts lhs-last with
    # rhs-first (no per-tile transpose). f32 accumulation directly into the
    # K-resident output block. No bias: cancelled exactly by BN mean subtraction.
    o_ref[...] += jnp.dot(x_ref[...], w_ref[...],
                          preferred_element_type=jnp.float32)

    @pl.when(k == pl.num_programs(1) - 1)
    def _epilogue():
        y = o_ref[...]                                      # (N, tn) f32, resident
        inv_n = jnp.float32(1.0 / n_valid)
        # Two-pass batch statistics (numerically safe vs E[y^2]-E[y]^2).
        mean = jnp.sum(y, axis=0, keepdims=True) * inv_n    # (1, tn)
        centered = y - mean
        var = jnp.sum(centered * centered, axis=0, keepdims=True) * inv_n
        scale = gb_ref[0:1, :] * jax.lax.rsqrt(var + EPS)   # gamma * rsqrt (EUP)
        o_ref[...] = centered * scale + gb_ref[1:2, :]      # 2 VPU ops / element


def fcbn_forward(x, weight, bias, gamma, beta, *, weights_bf16=False,
                 tn_cap=None, tk_cap=None):
    """x: [N, in], weight: [out, in], bias/gamma/beta: [out] -> [N, out].

    Matches PyTorch `BatchNorm1d(Linear(x))` in training mode (batch stats,
    biased variance, eps=1e-5). `bias` is accepted for API parity but has no
    effect on the output (BN mean subtraction cancels it) and is not DMA'd.
    """
    # TODO(synk): BatchNorm1d running_mean/running_var buffer updates (training
    # side effects) are not emitted; the forward output does not depend on them.
    del bias  # mathematically a no-op under training-mode BatchNorm

    n, in_f = x.shape
    out_f = weight.shape[0]

    cap = _vmem_capacity_bytes()
    budget = int(cap * 0.6)
    w_bytes = 2 if weights_bf16 else 4

    # ---- out-feature tiling (tn, parallel axis) ----
    out_p128 = _round_up(out_f, 128)
    tn_max = 512
    if out_p128 >= 256:
        tn_max = min(tn_max, out_p128 // 2)   # >=2 parallel out tiles (v7x megacore)
    # Keep the batch-resident, double-buffered output block within ~1/3 of budget.
    tn_vmem_cap = max(128, ((budget // 3) // max(1, 2 * 4 * n)) // 128 * 128)
    tn_max = min(tn_max, tn_vmem_cap)
    if tn_cap is not None:
        tn_max = min(tn_max, tn_cap)
    out_p, tn = _choose_dim_tiling(out_f, tn_max)

    # ---- contraction tiling (tk, arbitrary/innermost axis) ----
    rem = max(budget - 2 * n * tn * 4 - 2 * 2 * tn * 4, 0)
    per_tk = 2 * (n * 4 + tn * w_bytes)       # x + weight buffers, double-buffered
    tk_max = max(128, rem // max(per_tk, 1))
    if tk_cap is not None:
        tk_max = min(tk_max, tk_cap)
    in_p, tk = _choose_dim_tiling(in_f, tk_max)

    # ---- pad + lay out operands (padding zeros don't perturb the matmul) ----
    x_p = x if in_p == in_f else jnp.pad(x, ((0, 0), (0, in_p - in_f)))
    w_p = weight
    if (out_p, in_p) != (out_f, in_f):
        w_p = jnp.pad(weight, ((0, out_p - out_f), (0, in_p - in_f)))
    w_p = w_p.T                                # [in_p, out_p]: MXU-native layout
    if weights_bf16:
        w_p = w_p.astype(jnp.bfloat16)
    gb = jnp.stack([
        jnp.pad(gamma, (0, out_p - out_f), constant_values=1.0),
        jnp.pad(beta, (0, out_p - out_f)),
    ])                                          # (2, out_p): one thin DMA per tile

    grid_j = out_p // tn
    grid_k = in_p // tk
    grid = (grid_j, grid_k)

    # ---- VMEM budget / cost hints ----
    work = (2 * n * tk * 4 + 2 * tk * tn * w_bytes + 2 * n * tn * 4
            + 2 * 2 * tn * 4)
    vmem_limit = int(min(max(work * 1.5 + (2 << 20), 16 << 20), cap * 0.9))

    # x is re-streamed per out-tile sweep only when both grid axes are tiled.
    x_sweeps = grid_j if (grid_j > 1 and grid_k > 1) else 1
    cost = pl.CostEstimate(
        flops=int(2 * n * in_p * out_p + 8 * n * out_p),
        transcendentals=int(out_p),
        bytes_accessed=int(x_sweeps * n * in_p * 4 + in_p * out_p * w_bytes
                           + n * out_p * 4 + 2 * out_p * 4),
    )

    out = pl.pallas_call(
        functools.partial(fcbn_kernel, n_valid=n),
        out_shape=jax.ShapeDtypeStruct((n, out_p), jnp.float32),
        grid_spec=pltpu.PrefetchScalarGridSpec(
            num_scalar_prefetch=0,
            grid=grid,
            in_specs=[
                pl.BlockSpec((n, tk), lambda j, k: (0, k)),    # x
                pl.BlockSpec((tk, tn), lambda j, k: (k, j)),   # weight [in, out]
                pl.BlockSpec((2, tn), lambda j, k: (0, j)),    # gamma/beta packed
            ],
            out_specs=pl.BlockSpec((n, tn), lambda j, k: (0, j)),
        ),
        compiler_params=pltpu.CompilerParams(
            dimension_semantics=("parallel", "arbitrary"),
            vmem_limit_bytes=vmem_limit,
        ),
        cost_estimate=cost,
    )(x_p, w_p, gb)

    return out[:, :out_f] if out_p != out_f else out


def reference_forward(x, weight, bias, gamma, beta):
    y = x @ weight.T + bias
    mean = jnp.mean(y, axis=0, keepdims=True)
    var = jnp.mean((y - mean) ** 2, axis=0, keepdims=True)
    return (y - mean) / jnp.sqrt(var + EPS) * gamma + beta


def _run_case(key, n, in_c, out_c, *, affine_random=False, **kw):
    kx, kw_, kb, kg, kbe = jax.random.split(key, 5)
    x = jax.random.normal(kx, (n, in_c), dtype=jnp.float32)
    bound = 1.0 / (in_c ** 0.5)
    weight = jax.random.uniform(kw_, (out_c, in_c), minval=-bound, maxval=bound,
                                dtype=jnp.float32)
    bias = jax.random.uniform(kb, (out_c,), minval=-bound, maxval=bound,
                              dtype=jnp.float32)
    if affine_random:
        gamma = jax.random.normal(kg, (out_c,), dtype=jnp.float32)
        beta = jax.random.normal(kbe, (out_c,), dtype=jnp.float32)
    else:
        gamma = jnp.ones((out_c,), dtype=jnp.float32)   # BatchNorm1d weight default
        beta = jnp.zeros((out_c,), dtype=jnp.float32)   # BatchNorm1d bias default

    out = jax.block_until_ready(fcbn_forward(x, weight, bias, gamma, beta, **kw))
    ref = reference_forward(x, weight, bias, gamma, beta)
    assert out.shape == (n, out_c)
    err = jnp.max(jnp.abs(out - ref))
    assert jnp.allclose(out, ref, atol=1e-4, rtol=1e-4), (
        f"mismatch vs reference at ({n},{in_c})->({out_c}): max abs err {err:.3e}")


if __name__ == "__main__":
    key = jax.random.PRNGKey(0)
    k1, k2, k3 = jax.random.split(key, 3)

    # Module-consistent small shape: batch=8, in=32, out=64 (BN affine defaults).
    _run_case(k1, n=8, in_c=32, out_c=64)
    # Random affine params + non-multiple-of-8 batch + padded out features.
    _run_case(k2, n=6, in_c=640, out_c=384, affine_random=True)
    # Force multi-tile grid on both axes (parallel out tiles + K accumulation).
    _run_case(k3, n=8, in_c=768, out_c=512, affine_random=True,
              tn_cap=128, tk_cap=256)

    print("KERNEL_OK")
</pallas_src>

<mosaic_0001>
module attributes {stable_mosaic.version = 11 : i64} {
  func.func @fcbn_kernel(%arg0: i32, %arg1: i32, %arg2: memref<8x128xf32, #tpu.memory_space<vmem>>, %arg3: memref<128x128xf32, #tpu.memory_space<vmem>>, %arg4: memref<2x128xf32, #tpu.memory_space<vmem>>, %arg5: memref<8x128xf32, #tpu.memory_space<vmem>>) attributes {dimension_semantics = [#tpu.dimension_semantics<parallel>, #tpu.dimension_semantics<arbitrary>], iteration_bounds = array<i64: 1, 1>, scalar_prefetch = 0 : i64, scratch_operands = 0 : i64, tpu.core_type = #tpu.core_type<tc>, window_params = [{transform_indices = @transform_0, window_bounds = array<i64: 8, 128>}, {transform_indices = @transform_1, window_bounds = array<i64: 128, 128>}, {transform_indices = @transform_2, window_bounds = array<i64: 2, 128>}, {transform_indices = @transform_3, window_bounds = array<i64: 8, 128>}]} {
    %c0_i32 = arith.constant 0 : i32
    %0 = arith.cmpi eq, %arg1, %c0_i32 : i32
    %1 = arith.extui %0 : i1 to i32
    %c0_i32_0 = arith.constant 0 : i32
    %2 = arith.cmpi ne, %1, %c0_i32_0 : i32
    scf.if %2 {
      %cst_10 = arith.constant 0.000000e+00 : f32
      %12 = vector.broadcast %cst_10 : f32 to vector<8x128xf32>
      %c0_11 = arith.constant 0 : index
      %c0_12 = arith.constant 0 : index
      %13 = vector.load %arg5[%c0_11, %c0_12] : memref<8x128xf32, #tpu.memory_space<vmem>>, vector<8x128xf32>
      tpu.vector_store %arg5[%c0_11, %c0_12], %12 {strides = array<i32>} : memref<8x128xf32, #tpu.memory_space<vmem>>, vector<8x128xf32>,
    } else {
    }
    %c0 = arith.constant 0 : index
    %c0_1 = arith.constant 0 : index
    %3 = vector.load %arg5[%c0, %c0_1] : memref<8x128xf32, #tpu.memory_space<vmem>>, vector<8x128xf32>
    %c0_2 = arith.constant 0 : index
    %c0_3 = arith.constant 0 : index
    %4 = vector.load %arg2[%c0_2, %c0_3] : memref<8x128xf32, #tpu.memory_space<vmem>>, vector<8x128xf32>
    %c0_4 = arith.constant 0 : index
    %c0_5 = arith.constant 0 : index
    %5 = vector.load %arg3[%c0_4, %c0_5] : memref<128x128xf32, #tpu.memory_space<vmem>>, vector<128x128xf32>
    %cst = arith.constant dense<0.000000e+00> : vector<8x128xf32>
    %6 = tpu.matmul %4, %5, %cst {dimension_numbers = #tpu.dot_dimension_numbers<[1], [0], [0], [1], [0, 0, 1, 1], [], []>} : vector<8x128xf32>, vector<128x128xf32>, vector<8x128xf32> -> vector<8x128xf32>
    %7 = arith.addf %3, %6 : vector<8x128xf32>
    %c0_6 = arith.constant 0 : index
    %c0_7 = arith.constant 0 : index
    %8 = vector.load %arg5[%c0_6, %c0_7] : memref<8x128xf32, #tpu.memory_space<vmem>>, vector<8x128xf32>
    tpu.vector_store %arg5[%c0_6, %c0_7], %7 {strides = array<i32>} : memref<8x128xf32, #tpu.memory_space<vmem>>, vector<8x128xf32>,
    %c0_i32_8 = arith.constant 0 : i32
    %9 = arith.cmpi eq, %arg1, %c0_i32_8 : i32
    %10 = arith.extui %9 : i1 to i32
    %c0_i32_9 = arith.constant 0 : i32
    %11 = arith.cmpi ne, %10, %c0_i32_9 : i32
    scf.if %11 {
      %c0_10 = arith.constant 0 : index
      %c0_11 = arith.constant 0 : index
      %12 = vector.load %arg5[%c0_10, %c0_11] : memref<8x128xf32, #tpu.memory_space<vmem>>, vector<8x128xf32>
      %cst_12 = arith.constant dense<0.000000e+00> : vector<128xf32>
      %13 = vector.multi_reduction <add>, %12, %cst_12 [0] : vector<8x128xf32> to vector<128xf32>
      %14 = vector.shape_cast %13 : vector<128xf32> to vector<1x128xf32>
      %cst_13 = arith.constant 1.250000e-01 : f32
      %15 = vector.broadcast %cst_13 : f32 to vector<1x128xf32>
      %16 = arith.mulf %14, %15 : vector<1x128xf32>
      %17 = vector.broadcast %16 : vector<1x128xf32> to vector<8x128xf32>
      %18 = arith.subf %12, %17 : vector<8x128xf32>
      %19 = arith.mulf %18, %18 : vector<8x128xf32>
      %cst_14 = arith.constant dense<0.000000e+00> : vector<128xf32>
      %20 = vector.multi_reduction <add>, %19, %cst_14 [0] : vector<8x128xf32> to vector<128xf32>
      %21 = vector.shape_cast %20 : vector<128xf32> to vector<1x128xf32>
      %cst_15 = arith.constant 1.250000e-01 : f32
      %22 = vector.broadcast %cst_15 : f32 to vector<1x128xf32>
      %23 = arith.mulf %21, %22 : vector<1x128xf32>
      %c0_16 = arith.constant 0 : index
      %c0_17 = arith.constant 0 : index
      %24 = vector.load %arg4[%c0_16, %c0_17] : memref<2x128xf32, #tpu.memory_space<vmem>>, vector<1x128xf32>
      %cst_18 = arith.constant 9.99999974E-6 : f32
      %25 = vector.broadcast %cst_18 : f32 to vector<1x128xf32>
      %26 = arith.addf %23, %25 : vector<1x128xf32>
      %27 = math.rsqrt %26 : vector<1x128xf32>
      %28 = arith.mulf %24, %27 : vector<1x128xf32>
      %29 = vector.broadcast %28 : vector<1x128xf32> to vector<8x128xf32>
      %30 = arith.mulf %18, %29 : vector<8x128xf32>
      %c1 = arith.constant 1 : index
      %c0_19 = arith.constant 0 : index
      %31 = vector.load %arg4[%c1, %c0_19] : memref<2x128xf32, #tpu.memory_space<vmem>>, vector<1x128xf32>
      %32 = vector.broadcast %31 : vector<1x128xf32> to vector<8x128xf32>
      %33 = arith.addf %30, %32 : vector<8x128xf32>
      %c0_20 = arith.constant 0 : index
      %c0_21 = arith.constant 0 : index
      %34 = vector.load %arg5[%c0_20, %c0_21] : memref<8x128xf32, #tpu.memory_space<vmem>>, vector<8x128xf32>
      tpu.vector_store %arg5[%c0_20, %c0_21], %33 {strides = array<i32>} : memref<8x128xf32, #tpu.memory_space<vmem>>, vector<8x128xf32>,
    } else {
    }
    return
  }
  func.func @transform_0(%arg0: i32, %arg1: i32) -> (i32, i32) {
    %c0_i32 = arith.constant 0 : i32
    %c0_i32_0 = arith.constant 0 : i32
    return %c0_i32, %arg1 : i32, i32
  }
  func.func @transform_1(%arg0: i32, %arg1: i32) -> (i32, i32) {
    %c0_i32 = arith.constant 0 : i32
    return %arg1, %arg0 : i32, i32
  }
  func.func @transform_2(%arg0: i32, %arg1: i32) -> (i32, i32) {
    %c0_i32 = arith.constant 0 : i32
    %c0_i32_0 = arith.constant 0 : i32
    return %c0_i32, %arg0 : i32, i32
  }
  func.func @transform_3(%arg0: i32, %arg1: i32) -> (i32, i32) {
    %c0_i32 = arith.constant 0 : i32
    %c0_i32_0 = arith.constant 0 : i32
    return %c0_i32, %arg0 : i32, i32
  }
}

</mosaic_0001>

<llo_original>
// kernel: tpu_custom_call.1
$region0: #{tpu_custom_call.1}
  #allocation0 [shape = 'u32[]', space=smem, size = 0x4, offset = 0x4, fixed_abs, tag = 'smem constant byte address 0x4 - core index']
  #allocation1 [shape = 'u32[144,128]{1,0:T(1,128)}', space=vmem, size = 0x12000, scoped, tag = 'internal scratch']
  %s0 = inlined_call_operand.hbm [shape: f32[8,128], index: 0, kind: input, shape index: {}]
  %s1 = inlined_call_operand.hbm [shape: f32[128,128], index: 1, kind: input, shape index: {}]
  %s2 = inlined_call_operand.vmem [shape: f32[2,128], index: 2, kind: input, shape index: {}]
  %s3 = inlined_call_operand.hbm [shape: f32[8,128], index: 3, kind: output, shape index: {}]
  %s4 = sld [smem:[#allocation0]]
  $region38: #{tpu_custom_call.1} parent=0
    _
  %s6 = ssub.s32 1, %s4
  %s7 = scalar_select 0, %s6, %s4
  $region1: #{tpu_custom_call.1} parent=0
    #allocation2 [shape = 'u8[4096]{0}', space=vmem, size = 0x1000, scoped, tag = 'input window, operand 0, single buffered']
    #allocation3 [shape = 's32[1]{0}', space=sflag, size = 0x4, scoped, tag = 'scoped memory for tpu_custom_call.1']
    #allocation4 [shape = 's32[1]{0}', space=sflag, size = 0x4, scoped, tag = 'scoped memory for tpu_custom_call.1']
    #allocation5 [shape = 'u8[65536]{0}', space=vmem, size = 0x10000, scoped, tag = 'input window, operand 1, single buffered']
    #allocation6 [shape = 's32[1]{0}', space=sflag, size = 0x4, scoped, tag = 'scoped memory for tpu_custom_call.1']
    #allocation7 [shape = 'u8[4096]{0}', space=vmem, size = 0x1000, scoped, tag = 'output window, operand 0, single buffered']
    %8 = vsyncpa [#allocation3], 0
    %9 = vsyncpa [#allocation6], 0
    %10 = vsyncpa [#allocation4], 0
    // Predicated region
    $region2: #{tpu_custom_call.1} parent=1 // pred_check
      _
    $region3: #{tpu_custom_call.1} parent=1 // pred_check_branch
      %12 = sbr.rel (0) target = $region5
    $region4: #{tpu_custom_call.1} parent=1 // pred_region
      %s14 = ssub.s32 128, 128
      %15 = vsyncadd [#allocation3], %s14
      %s17 = sshll.u32 [#allocation2], 4
      %s18 = int_to_ptr.vmem [resolvable:$true] %s17
      %20 = dma.hbm_to_vmem [thread:$0]  %s0, 128, %s18, [#allocation3]
    $region5: #{tpu_custom_call.1} parent=1 // pred_fallthru
      _
    // Predicated region
    $region6: #{tpu_custom_call.1} parent=1 // pred_check
      _
    $region7: #{tpu_custom_call.1} parent=1 // pred_check_branch
      %22 = sbr.rel (0) target = $region9
    $region8: #{tpu_custom_call.1} parent=1 // pred_region
      %s24 = ssub.s32 2048, 2048
      %25 = vsyncadd [#allocation6], %s24
      %s26 = sshll.u32 [#allocation5], 4
      %s27 = int_to_ptr.vmem [resolvable:$true] %s26
      %32 = dma.hbm_to_vmem [thread:$0]  %s1, 2048, %s27, [#allocation6], 128, 128, 8
    $region9: #{tpu_custom_call.1} parent=1 // pred_fallthru
      _
    // Predicated region
    $region10: #{tpu_custom_call.1} parent=1 // pred_check
      _
    $region11: #{tpu_custom_call.1} parent=1 // pred_check_branch
      %34 = sbr.rel (0) target = $region13
    $region12: #{tpu_custom_call.1} parent=1 // pred_region
      _
    $region13: #{tpu_custom_call.1} parent=1 // pred_fallthru
      _
    // Predicated region
    $region14: #{tpu_custom_call.1} parent=1 // pred_check
      _
    $region15: #{tpu_custom_call.1} parent=1 // pred_check_branch
      %36 = sbr.rel (0) target = $region17
    $region16: #{tpu_custom_call.1} parent=1 // pred_region
      %37 = dma.done [#allocation3], 128
    $region17: #{tpu_custom_call.1} parent=1 // pred_fallthru
      _
    // Predicated region
    $region18: #{tpu_custom_call.1} parent=1 // pred_check
      _
    $region19: #{tpu_custom_call.1} parent=1 // pred_check_branch
      %39 = sbr.rel (0) target = $region21
    $region20: #{tpu_custom_call.1} parent=1 // pred_region
      %40 = dma.done [#allocation6], 2048
    $region21: #{tpu_custom_call.1} parent=1 // pred_fallthru
      _
    %p41 = scmp.eq.s32.totalorder 0, 0
    // Predicated region
    $region22: #{tpu_custom_call.1} parent=1 // pred_check
      %p42 = pneg %p41
    $region23: #{tpu_custom_call.1} parent=1 // pred_check_branch
      %44 = sbr.rel (%p42) target = $region25
    $region24: #{tpu_custom_call.1} parent=1 // pred_region
      %45 = vst [vmem:[#allocation7] sm:$0xff] 0.0
    $region25: #{tpu_custom_call.1} parent=1 // pred_fallthru
      _
    %v46 = vld [vmem:[#allocation7] sm:$0xff]
    %v47 = vld [vmem:[#allocation2] sm:$0xff]
    %v48 = vld [vmem:[#allocation5] sm:$0xff]
    %v49 = vld [vmem:[#allocation5 + $0x8] sm:$0xff]
    %v50 = vld [vmem:[#allocation5 + $0x10] sm:$0xff]
    %v51 = vld [vmem:[#allocation5 + $0x18] sm:$0xff]
    %v52 = vld [vmem:[#allocation5 + $0x20] sm:$0xff]
    %v53 = vld [vmem:[#allocation5 + $0x28] sm:$0xff]
    %v54 = vld [vmem:[#allocation5 + $0x30] sm:$0xff]
    %v55 = vld [vmem:[#allocation5 + $0x38] sm:$0xff]
    %v56 = vld [vmem:[#allocation5 + $0x40] sm:$0xff]
    %v57 = vld [vmem:[#allocation5 + $0x48] sm:$0xff]
    %v58 = vld [vmem:[#allocation5 + $0x50] sm:$0xff]
    %v59 = vld [vmem:[#allocation5 + $0x58] sm:$0xff]
    %v60 = vld [vmem:[#allocation5 + $0x60] sm:$0xff]
    %v61 = vld [vmem:[#allocation5 + $0x68] sm:$0xff]
    %v62 = vld [vmem:[#allocation5 + $0x70] sm:$0xff]
    %v63 = vld [vmem:[#allocation5 + $0x78] sm:$0xff]
    %64 = vmatprep.subr.mxu0 0.0
    %65 = vmatpush1.msra.mxu0 %v63
    %66 = vmatprep.subr.mxu0 0.0
    %67 = vmatpush1.msra.mxu0 %v62
    %68 = vmatprep.subr.mxu0 0.0
    %69 = vmatpush1.msra.mxu0 %v61
    %70 = vmatprep.subr.mxu0 0.0
    %71 = vmatpush1.msra.mxu0 %v60
    %72 = vmatprep.subr.mxu0 0.0
    %73 = vmatpush1.msra.mxu0 %v59
    %74 = vmatprep.subr.mxu0 0.0
    %75 = vmatpush1.msra.mxu0 %v58
    %76 = vmatprep.subr.mxu0 0.0
    %77 = vmatpush1.msra.mxu0 %v57
    %78 = vmatprep.subr.mxu0 0.0
    %79 = vmatpush1.msra.mxu0 %v56
    %80 = vmatprep.subr.mxu0 0.0
    %81 = vmatpush1.msra.mxu0 %v55
    %82 = vmatprep.subr.mxu0 0.0
    %83 = vmatpush1.msra.mxu0 %v54
    %84 = vmatprep.subr.mxu0 0.0
    %85 = vmatpush1.msra.mxu0 %v53
    %86 = vmatprep.subr.mxu0 0.0
    %87 = vmatpush1.msra.mxu0 %v52
    %88 = vmatprep.subr.mxu0 0.0
    %89 = vmatpush1.msra.mxu0 %v51
    %90 = vmatprep.subr.mxu0 0.0
    %91 = vmatpush1.msra.mxu0 %v50
    %92 = vmatprep.subr.mxu0 0.0
    %93 = vmatpush1.msra.mxu0 %v49
    %94 = vmatprep.subr.mxu0 0.0
    %95 = vmatpush1.msra.mxu0 %v48
    %96 = vmatprep.subr.mxu0 0.0
    %97 = vmatpush2.msra.mxu0 0.0
    %98 = vmatprep.subr.mxu0 0.0
    %99 = vmatpush2.msra.mxu0 0.0
    %100 = vmatprep.subr.mxu0 0.0
    %101 = vmatpush2.msra.mxu0 0.0
    %102 = vmatprep.subr.mxu0 0.0
    %103 = vmatpush2.msra.mxu0 0.0
    %104 = vmatprep.subr.mxu0 0.0
    %105 = vmatpush2.msra.mxu0 0.0
    %106 = vmatprep.subr.mxu0 0.0
    %107 = vmatpush2.msra.mxu0 0.0
    %108 = vmatprep.subr.mxu0 0.0
    %109 = vmatpush2.msra.mxu0 0.0
    %110 = vmatprep.subr.mxu0 0.0
    %111 = vmatpush2.msra.mxu0 0.0
    %112 = vmatprep.subr.mxu0 0.0
    %113 = vmatpush2.msra.mxu0 0.0
    %114 = vmatprep.subr.mxu0 0.0
    %115 = vmatpush2.msra.mxu0 0.0
    %116 = vmatprep.subr.mxu0 0.0
    %117 = vmatpush2.msra.mxu0 0.0
    %118 = vmatprep.subr.mxu0 0.0
    %119 = vmatpush2.msra.mxu0 0.0
    %120 = vmatprep.subr.mxu0 0.0
    %121 = vmatpush2.msra.mxu0 0.0
    %122 = vmatprep.subr.mxu0 0.0
    %123 = vmatpush2.msra.mxu0 0.0
    %124 = vmatprep.subr.mxu0 0.0
    %125 = vmatpush2.msra.mxu0 0.0
    %126 = vmatprep.subr.mxu0 0.0
    %127 = vmatpush2.msra.mxu0 0.0
    %128 = vmatprep.mubr.f32.mxu0 0.0
    %129 = vmatmul.mubr.f32.gmra.mxu0 %v47
    %v130 = vpop.f32.mrf.mxu0
    %v131 = vadd.f32 0.0, %v130
    %v132 = vpop.f32.mrf.mxu0
    %133 = vdwg.mxu0
    %v134 = vadd.f32 %v46, %v131
    %135 = vst [vmem:[#allocation7] sm:$0xff] %v134
    // Predicated region
    $region26: #{tpu_custom_call.1} parent=1 // pred_check
      %p136 = pneg %p41
    $region27: #{tpu_custom_call.1} parent=1 // pred_check_branch
      %138 = sbr.rel (%p136) target = $region29
    $region28: #{tpu_custom_call.1} parent=1 // pred_region
      %v139 = vld [vmem:[#allocation7] sm:$0xff]
      %v140 = vrot.slane %v139, 4
      %v141 = vadd.f32 %v139, %v140
      %v142 = vrot.slane %v141, 2
      %v143 = vadd.f32 %v141, %v142
      %v144 = vrot.slane %v143, 1
      %v145 = vadd.f32 %v143, %v144
      %v146 = vmul.f32 %v145, 0.125
      %v147 = vsub.f32 %v139, %v146
      %v148 = vmul.f32 %v147, %v147
      %v149 = vrot.slane %v148, 4
      %v150 = vadd.f32 %v148, %v149
      %v151 = vrot.slane %v150, 2
      %v152 = vadd.f32 %v150, %v151
      %v153 = vrot.slane %v152, 1
      %v154 = vadd.f32 %v152, %v153
      %v155 = vmul.f32 %v154, 0.125
      %v156 = vld [vmem:[%s2] sm:$0x1]
      %v157 = vadd.f32 %v155, 1e-05
      %v158 = vrsqrt.pop %v157
      %v159 = vmul.f32 %v156, %v158
      %v160 = vlaneseq
      %v161 = vshrl.u32 %v160, 7
      %v162 = vsub.s32 0, %v161
      %v163 = vrot.slane %v159, %v162
      %v164 = vmul.f32 %v147, %v163
      %v165 = vld [vmem:[%s2 + $0x1] sm:$0x1]
      %v166 = vlaneseq
      %v167 = vshrl.u32 %v166, 7
      %v168 = vsub.s32 0, %v167
      %v169 = vrot.slane %v165, %v168
      %v170 = vadd.f32 %v164, %v169
      %171 = vst [vmem:[#allocation7] sm:$0xff] %v170
    $region29: #{tpu_custom_call.1} parent=1 // pred_fallthru
      _
    // Predicated region
    $region30: #{tpu_custom_call.1} parent=1 // pred_check
      _
    $region31: #{tpu_custom_call.1} parent=1 // pred_check_branch
      %173 = sbr.rel (0) target = $region33
    $region32: #{tpu_custom_call.1} parent=1 // pred_region
      %s175 = ssub.s32 128, 128
      %176 = vsyncadd [#allocation4], %s175
      %s178 = sshll.u32 [#allocation7], 4
      %s179 = int_to_ptr.vmem [resolvable:$true] %s178
      %181 = dma.vmem_to_hbm [thread:$0]  %s179, 128, %s3, [#allocation4]
    $region33: #{tpu_custom_call.1} parent=1 // pred_fallthru
      _
    // Predicated region
    $region34: #{tpu_custom_call.1} parent=1 // pred_check
      _
    $region35: #{tpu_custom_call.1} parent=1 // pred_check_branch
      %183 = sbr.rel (0) target = $region37
    $region36: #{tpu_custom_call.1} parent=1 // pred_region
      %184 = dma.done [#allocation4], 128
    $region37: #{tpu_custom_call.1} parent=1 // pred_fallthru
      _
    %185 = vsyncpa [#allocation3], 1
    %186 = vsyncpa [#allocation6], 1
    %187 = vsyncpa [#allocation4], 1

</llo_original>
